<compile_context>
chip_gen: v7x
topology: tpu7x:2x2x1
jax: 0.10.0
libtpu: 0.0.40
codegen_flags: <defaults>
</compile_context>

<pallas_src>
import functools
import math

import jax
import jax.numpy as jnp
from jax.experimental import pallas as pl
from jax.experimental.pallas import tpu as pltpu


def _sigmoidal_flow_kernel(x_ref, a_ref, b_ref,
                           w1_ref, b1_ref, w2_ref, b2_ref, w3_ref, b3_ref,
                           z_ref, ld_ref, *, chunk, n_chunks):
    # x/a/b/z/ld: (1, TM);  w1/b1/b2/w3: (H, 1);  w2: (H, H);  b3: (1, 1)
    # Hoist the (tiny) weights out of the chunk loop once per grid step.
    w1 = w1_ref[...]
    b1 = b1_ref[...]
    w2 = w2_ref[...]
    b2 = b2_ref[...]
    w3 = w3_ref[...]
    b3 = b3_ref[...]

    # Static chunk loop: offsets are Python ints -> zero-cost static slices, and the
    # (H, chunk) intermediates (~8 vregs each at H=16, chunk=512) never spill to VMEM.
    for c in range(n_chunks):
        lo, hi = c * chunk, (c + 1) * chunk
        x = x_ref[:, lo:hi]                                           # (1, chunk)
        a = a_ref[:, lo:hi]
        bb = b_ref[:, lo:hi]

        # Layer 1: Linear(1 -> H) + tanh  ((H,1)*(1,chunk) broadcast, VPU + EUP).
        h1 = jnp.tanh(w1 * x + b1)                                    # (H, chunk)
        # Layer 2: Linear(H -> H) + tanh  ((H,H)@(H,chunk) on the MXU, f32 accumulate).
        h2 = jnp.tanh(
            jnp.dot(w2, h1, preferred_element_type=jnp.float32) + b2
        )                                                             # (H, chunk)
        # Layer 3: Linear(H -> 1) as a sublane reduction -> lane-dense (1, chunk) row.
        h = jnp.sum(h2 * w3, axis=0, keepdims=True) + b3              # (1, chunk)

        s = jax.nn.sigmoid(bb * h)
        z_ref[:, lo:hi] = x + a * s
        # Matches torch.log(1 + ...) exactly (jnp.log1p would be marginally more precise
        # near 0, but plain log mirrors the module and is guaranteed to lower).
        ld_ref[:, lo:hi] = jnp.log(1.0 + a * bb * s * (1.0 - s))


def _round_down(v, m):
    return max(m, (v // m) * m)


def sigmoidal_flow_forward(x, params, *, target_lanes=32768, chunk_lanes=512,
                           resident_ab_max_unit=8192):
    """Pallas implementation of SigmoidalFlow.forward. Returns (z, log_det)."""
    orig_shape = x.shape
    input_dim = orig_shape[-1]
    H = params["w1"].shape[1]

    # Kernel-oriented parameter layouts (H on sublanes).
    w1_col = params["w1"].reshape(H, 1).astype(jnp.float32)       # (H, 1)
    b1_col = params["b1"].reshape(H, 1).astype(jnp.float32)       # (H, 1)
    w2_k = params["w2"].T.astype(jnp.float32)                     # (H_out, H_in): h2 = W2 @ h1
    b2_col = params["b2"].reshape(H, 1).astype(jnp.float32)       # (H, 1)
    w3_col = params["w3"].reshape(H, 1).astype(jnp.float32)       # (H, 1)
    b3 = params["b3"].reshape(1, 1).astype(jnp.float32)           # (1, 1)

    xf = x.reshape(-1).astype(jnp.float32)
    M = xf.shape[0]

    # Tile-size unit.  If lcm(128, input_dim) is small, TM is a multiple of it so the
    # per-feature a/b pattern is identical in every tile (resident a/b rows).  Otherwise
    # fall back to a plain 128 unit and pass full-length a/b rows tiled like x.
    lcm = (128 * input_dim) // math.gcd(128, input_dim)
    resident_ab = lcm <= resident_ab_max_unit
    unit = lcm if resident_ab else 128

    # VMEM-aware cap: x/z/ld double-buffered + a/b rows ~= 48 B/lane (with margin).
    try:
        vmem_cap = int(pltpu.get_tpu_info().vmem_capacity_bytes)
    except Exception:  # not on TPU / info unavailable -> assume the smallest (v7x) VMEM
        vmem_cap = 64 * 1024 * 1024
    max_tm_vmem = _round_down(int(vmem_cap * 0.5) // 48, unit)

    desired = min(target_lanes, max(M, 1))
    if M >= 2 * unit:
        # Keep at least 2 tiles so the grid can shard across both v7x TensorCores.
        desired = min(desired, _round_down(-(-M // 2), unit))
    if max_tm_vmem >= unit:
        desired = min(desired, max_tm_vmem)
    tm = _round_down(desired, unit)

    n_tiles = -(-M // tm)
    M_pad = n_tiles * tm
    if M_pad != M:
        xf = jnp.pad(xf, (0, M_pad - M))
    xf = xf.reshape(1, M_pad)

    # Per-feature a/b rows.
    if resident_ab:
        a_row = jnp.tile(params["a"].astype(jnp.float32), tm // input_dim).reshape(1, tm)
        b_row = jnp.tile(params["b"].astype(jnp.float32), tm // input_dim).reshape(1, tm)
        ab_spec = pl.BlockSpec((1, tm), lambda i: (0, 0))          # grid-invariant, resident
    else:
        reps = M // input_dim                                      # last axis == input_dim
        a_full = jnp.tile(params["a"].astype(jnp.float32), reps)
        b_full = jnp.tile(params["b"].astype(jnp.float32), reps)
        if M_pad != M:
            a_full = jnp.pad(a_full, (0, M_pad - M))
            b_full = jnp.pad(b_full, (0, M_pad - M))
        a_row = a_full.reshape(1, M_pad)
        b_row = b_full.reshape(1, M_pad)
        ab_spec = pl.BlockSpec((1, tm), lambda i: (0, i))          # tiled like x

    # Inner chunk size: a multiple of 128 that divides tm (>= 128 always, since tm is).
    chunk = min(chunk_lanes, tm)
    while tm % chunk != 0:
        chunk //= 2
    n_chunks = tm // chunk

    tile_spec = pl.BlockSpec((1, tm), lambda i: (0, i))
    col_h = pl.BlockSpec((H, 1), lambda i: (0, 0))

    kernel = functools.partial(_sigmoidal_flow_kernel, chunk=chunk, n_chunks=n_chunks)

    # Explicit scoped-VMEM limit (keeps large-tm configs valid on v7x's 32 MiB default).
    vmem_needed = 56 * tm + (H * H + 6 * H + 64) * 4 + (2 << 20)
    vmem_limit = int(min(vmem_cap * 0.8, max(2 * vmem_needed, 32 * 1024 * 1024)))

    z, log_det = pl.pallas_call(
        kernel,
        out_shape=(
            jax.ShapeDtypeStruct((1, M_pad), jnp.float32),
            jax.ShapeDtypeStruct((1, M_pad), jnp.float32),
        ),
        grid=(n_tiles,),
        in_specs=[
            tile_spec,                                   # x
            ab_spec,                                     # a
            ab_spec,                                     # b
            col_h,                                       # w1 (H,1)
            col_h,                                       # b1 (H,1)
            pl.BlockSpec((H, H), lambda i: (0, 0)),      # w2 (H,H)
            col_h,                                       # b2 (H,1)
            col_h,                                       # w3 (H,1)
            pl.BlockSpec((1, 1), lambda i: (0, 0)),      # b3
        ],
        out_specs=(tile_spec, tile_spec),
        compiler_params=pltpu.CompilerParams(
            dimension_semantics=("parallel",),           # shard tiles across TCs (v7x megacore)
            vmem_limit_bytes=vmem_limit,
        ),
        cost_estimate=pl.CostEstimate(
            flops=2 * M_pad * H * H + 8 * M_pad * H + 10 * M_pad,
            transcendentals=M_pad * (2 * H + 2),
            bytes_accessed=12 * M_pad,
        ),
    )(xf, a_row, b_row, w1_col, b1_col, w2_k, b2_col, w3_col, b3)

    z = z.reshape(-1)[:M].reshape(orig_shape)
    log_det = log_det.reshape(-1)[:M].reshape(orig_shape)
    return z, log_det


def init_params(key, input_dim, hidden_dim=16):
    """Deterministic synthetic parameters matching SigmoidalFlow.__init__ shapes.

    a, b are scaled by 0.5 so the log(1 + a*b*s*(1-s)) argument stays positive for the
    test data (the unconstrained PyTorch init can produce NaNs there; inherited behavior).
    """
    ks = jax.random.split(key, 8)
    p = {
        "a": 0.5 * jax.random.normal(ks[0], (input_dim,), jnp.float32),
        "b": 0.5 * jax.random.normal(ks[1], (input_dim,), jnp.float32),
        # torch Linear stores W as (out, in); we store transposes ready for x @ W^T.
        "w1": jax.random.normal(ks[2], (1, hidden_dim), jnp.float32) * 0.5,
        "b1": jax.random.normal(ks[3], (hidden_dim,), jnp.float32) * 0.1,
        "w2": jax.random.normal(ks[4], (hidden_dim, hidden_dim), jnp.float32) * 0.25,
        "b2": jax.random.normal(ks[5], (hidden_dim,), jnp.float32) * 0.1,
        "w3": jax.random.normal(ks[6], (hidden_dim,), jnp.float32) * 0.25,
        "b3": jax.random.normal(ks[7], (1,), jnp.float32) * 0.1,
    }
    return p


def reference_forward(x, params):
    """Pure-JAX reference reproducing the PyTorch forward exactly."""
    h = jnp.tanh(x[..., None] * params["w1"][0] + params["b1"])        # (..., D, H)
    h = jnp.tanh(jnp.einsum("...h,hk->...k", h, params["w2"]) + params["b2"])
    h = jnp.einsum("...h,h->...", h, params["w3"]) + params["b3"][0]   # (..., D)
    s = jax.nn.sigmoid(params["b"] * h)
    z = x + params["a"] * s
    log_det = jnp.log(1.0 + params["a"] * params["b"] * s * (1.0 - s))
    return z, log_det


# TODO(synk): the fixed-point `inverse` method of SigmoidalFlow (data-dependent early
# exit) is not implemented — only the forward transformation was requested.

if __name__ == "__main__":
    key = jax.random.PRNGKey(0)
    k_x, k_p, k_x2, k_x3, k_p3 = jax.random.split(key, 5)

    # Primary small case (module defaults: hidden_dim=16).
    batch, seq, input_dim, hidden_dim = 2, 8, 16, 16
    x = jax.random.normal(k_x, (batch, seq, input_dim), jnp.float32)
    params = init_params(k_p, input_dim, hidden_dim)

    z, log_det = sigmoidal_flow_forward(x, params)
    jax.block_until_ready((z, log_det))
    z_ref, ld_ref = reference_forward(x, params)
    assert z.shape == x.shape and log_det.shape == x.shape
    assert jnp.allclose(z, z_ref, atol=1e-5, rtol=1e-5)
    assert jnp.allclose(log_det, ld_ref, atol=1e-5, rtol=1e-5)

    # Secondary case: exercises multi-tile grid + multi-chunk inner loop.
    x2 = jax.random.normal(k_x2, (4, 32, input_dim), jnp.float32)
    z2, ld2 = sigmoidal_flow_forward(x2, params)
    jax.block_until_ready((z2, ld2))
    z2_ref, ld2_ref = reference_forward(x2, params)
    assert jnp.allclose(z2, z2_ref, atol=1e-5, rtol=1e-5)
    assert jnp.allclose(ld2, ld2_ref, atol=1e-5, rtol=1e-5)

    # Third case: non-power-of-two feature dim (exercises padding + odd lcm handling).
    x3 = jax.random.normal(k_x3, (2, 8, 13), jnp.float32)
    params3 = init_params(k_p3, 13, hidden_dim)
    z3, ld3 = sigmoidal_flow_forward(x3, params3)
    jax.block_until_ready((z3, ld3))
    z3_ref, ld3_ref = reference_forward(x3, params3)
    assert jnp.allclose(z3, z3_ref, atol=1e-5, rtol=1e-5)
    assert jnp.allclose(ld3, ld3_ref, atol=1e-5, rtol=1e-5)

    print("KERNEL_OK")
</pallas_src>

<mosaic_0001>
module attributes {stable_mosaic.version = 11 : i64} {
  func.func @_sigmoidal_flow_kernel(%arg0: i32, %arg1: memref<1x128xf32, #tpu.memory_space<vmem>>, %arg2: memref<1x128xf32, #tpu.memory_space<vmem>>, %arg3: memref<1x128xf32, #tpu.memory_space<vmem>>, %arg4: memref<16x1xf32, #tpu.memory_space<vmem>>, %arg5: memref<16x1xf32, #tpu.memory_space<vmem>>, %arg6: memref<16x16xf32, #tpu.memory_space<vmem>>, %arg7: memref<16x1xf32, #tpu.memory_space<vmem>>, %arg8: memref<16x1xf32, #tpu.memory_space<vmem>>, %arg9: memref<1x1xf32, #tpu.memory_space<vmem>>, %arg10: memref<1x128xf32, #tpu.memory_space<vmem>>, %arg11: memref<1x128xf32, #tpu.memory_space<vmem>>) attributes {dimension_semantics = [#tpu.dimension_semantics<parallel>], iteration_bounds = array<i64: 2>, scalar_prefetch = 0 : i64, scratch_operands = 0 : i64, tpu.core_type = #tpu.core_type<tc>, window_params = [{transform_indices = @transform_0, window_bounds = array<i64: 1, 128>}, {pipeline_mode = #tpu.pipeline_mode<synchronous>, transform_indices = @transform_1, window_bounds = array<i64: 1, 128>}, {pipeline_mode = #tpu.pipeline_mode<synchronous>, transform_indices = @transform_2, window_bounds = array<i64: 1, 128>}, {pipeline_mode = #tpu.pipeline_mode<synchronous>, transform_indices = @transform_3, window_bounds = array<i64: 16, 1>}, {pipeline_mode = #tpu.pipeline_mode<synchronous>, transform_indices = @transform_4, window_bounds = array<i64: 16, 1>}, {pipeline_mode = #tpu.pipeline_mode<synchronous>, transform_indices = @transform_5, window_bounds = array<i64: 16, 16>}, {pipeline_mode = #tpu.pipeline_mode<synchronous>, transform_indices = @transform_6, window_bounds = array<i64: 16, 1>}, {pipeline_mode = #tpu.pipeline_mode<synchronous>, transform_indices = @transform_7, window_bounds = array<i64: 16, 1>}, {pipeline_mode = #tpu.pipeline_mode<synchronous>, transform_indices = @transform_8, window_bounds = array<i64: 1, 1>}, {transform_indices = @transform_9, window_bounds = array<i64: 1, 128>}, {transform_indices = @transform_10, window_bounds = array<i64: 1, 128>}]} {
    %c0 = arith.constant 0 : index
    %c0_0 = arith.constant 0 : index
    %0 = vector.load %arg4[%c0, %c0_0] : memref<16x1xf32, #tpu.memory_space<vmem>>, vector<16x1xf32>
    %c0_1 = arith.constant 0 : index
    %c0_2 = arith.constant 0 : index
    %1 = vector.load %arg5[%c0_1, %c0_2] : memref<16x1xf32, #tpu.memory_space<vmem>>, vector<16x1xf32>
    %c0_3 = arith.constant 0 : index
    %c0_4 = arith.constant 0 : index
    %2 = vector.load %arg6[%c0_3, %c0_4] : memref<16x16xf32, #tpu.memory_space<vmem>>, vector<16x16xf32>
    %c0_5 = arith.constant 0 : index
    %c0_6 = arith.constant 0 : index
    %3 = vector.load %arg7[%c0_5, %c0_6] : memref<16x1xf32, #tpu.memory_space<vmem>>, vector<16x1xf32>
    %c0_7 = arith.constant 0 : index
    %c0_8 = arith.constant 0 : index
    %4 = vector.load %arg8[%c0_7, %c0_8] : memref<16x1xf32, #tpu.memory_space<vmem>>, vector<16x1xf32>
    %c0_9 = arith.constant 0 : index
    %c0_10 = arith.constant 0 : index
    %5 = vector.load %arg9[%c0_9, %c0_10] : memref<1x1xf32, #tpu.memory_space<vmem>>, vector<1x1xf32>
    %c0_11 = arith.constant 0 : index
    %c0_12 = arith.constant 0 : index
    %6 = vector.load %arg1[%c0_11, %c0_12] : memref<1x128xf32, #tpu.memory_space<vmem>>, vector<1x128xf32>
    %c0_13 = arith.constant 0 : index
    %c0_14 = arith.constant 0 : index
    %7 = vector.load %arg2[%c0_13, %c0_14] : memref<1x128xf32, #tpu.memory_space<vmem>>, vector<1x128xf32>
    %c0_15 = arith.constant 0 : index
    %c0_16 = arith.constant 0 : index
    %8 = vector.load %arg3[%c0_15, %c0_16] : memref<1x128xf32, #tpu.memory_space<vmem>>, vector<1x128xf32>
    %9 = vector.broadcast %0 : vector<16x1xf32> to vector<16x128xf32>
    %10 = vector.broadcast %6 : vector<1x128xf32> to vector<16x128xf32>
    %11 = arith.mulf %9, %10 : vector<16x128xf32>
    %12 = vector.broadcast %1 : vector<16x1xf32> to vector<16x128xf32>
    %13 = arith.addf %11, %12 : vector<16x128xf32>
    %14 = math.tanh %13 : vector<16x128xf32>
    %cst = arith.constant dense<0.000000e+00> : vector<16x128xf32>
    %15 = tpu.matmul %2, %14, %cst {dimension_numbers = #tpu.dot_dimension_numbers<[1], [0], [0], [1], [0, 0, 1, 1], [], []>} : vector<16x16xf32>, vector<16x128xf32>, vector<16x128xf32> -> vector<16x128xf32>
    %16 = vector.broadcast %3 : vector<16x1xf32> to vector<16x128xf32>
    %17 = arith.addf %15, %16 : vector<16x128xf32>
    %18 = math.tanh %17 : vector<16x128xf32>
    %19 = vector.broadcast %4 : vector<16x1xf32> to vector<16x128xf32>
    %20 = arith.mulf %18, %19 : vector<16x128xf32>
    %cst_17 = arith.constant dense<0.000000e+00> : vector<128xf32>
    %21 = vector.multi_reduction <add>, %20, %cst_17 [0] : vector<16x128xf32> to vector<128xf32>
    %22 = vector.shape_cast %21 : vector<128xf32> to vector<1x128xf32>
    %23 = vector.broadcast %5 : vector<1x1xf32> to vector<1x128xf32>
    %24 = arith.addf %22, %23 : vector<1x128xf32>
    %25 = arith.mulf %8, %24 : vector<1x128xf32>
    %26 = arith.negf %25 : vector<1x128xf32>
    %27 = math.exp %26 : vector<1x128xf32>
    %cst_18 = arith.constant 1.000000e+00 : f32
    %28 = vector.broadcast %cst_18 : f32 to vector<1x128xf32>
    %29 = arith.addf %28, %27 : vector<1x128xf32>
    %30 = arith.divf %28, %29 : vector<1x128xf32>
    %31 = arith.mulf %7, %30 : vector<1x128xf32>
    %32 = arith.addf %6, %31 : vector<1x128xf32>
    %c0_19 = arith.constant 0 : index
    %c0_20 = arith.constant 0 : index
    %33 = vector.load %arg10[%c0_19, %c0_20] : memref<1x128xf32, #tpu.memory_space<vmem>>, vector<1x128xf32>
    tpu.vector_store %arg10[%c0_19, %c0_20], %32 {strides = array<i32>} : memref<1x128xf32, #tpu.memory_space<vmem>>, vector<1x128xf32>,
    %34 = arith.mulf %7, %8 : vector<1x128xf32>
    %35 = arith.mulf %34, %30 : vector<1x128xf32>
    %cst_21 = arith.constant 1.000000e+00 : f32
    %36 = vector.broadcast %cst_21 : f32 to vector<1x128xf32>
    %37 = arith.subf %36, %30 : vector<1x128xf32>
    %38 = arith.mulf %35, %37 : vector<1x128xf32>
    %cst_22 = arith.constant 1.000000e+00 : f32
    %39 = vector.broadcast %cst_22 : f32 to vector<1x128xf32>
    %40 = arith.addf %39, %38 : vector<1x128xf32>
    %41 = math.log %40 : vector<1x128xf32>
    %c0_23 = arith.constant 0 : index
    %c0_24 = arith.constant 0 : index
    %42 = vector.load %arg11[%c0_23, %c0_24] : memref<1x128xf32, #tpu.memory_space<vmem>>, vector<1x128xf32>
    tpu.vector_store %arg11[%c0_23, %c0_24], %41 {strides = array<i32>} : memref<1x128xf32, #tpu.memory_space<vmem>>, vector<1x128xf32>,
    return
  }
  func.func @transform_0(%arg0: i32) -> (i32, i32) {
    %c0_i32 = arith.constant 0 : i32
    %c0_i32_0 = arith.constant 0 : i32
    return %c0_i32, %arg0 : i32, i32
  }
  func.func @transform_1(%arg0: i32) -> (i32, i32) {
    %c0_i32 = arith.constant 0 : i32
    %c0_i32_0 = arith.constant 0 : i32
    %c0_i32_1 = arith.constant 0 : i32
    return %c0_i32, %c0_i32_0 : i32, i32
  }
  func.func @transform_2(%arg0: i32) -> (i32, i32) {
    %c0_i32 = arith.constant 0 : i32
    %c0_i32_0 = arith.constant 0 : i32
    %c0_i32_1 = arith.constant 0 : i32
    return %c0_i32, %c0_i32_0 : i32, i32
  }
  func.func @transform_3(%arg0: i32) -> (i32, i32) {
    %c0_i32 = arith.constant 0 : i32
    %c0_i32_0 = arith.constant 0 : i32
    %c0_i32_1 = arith.constant 0 : i32
    return %c0_i32, %c0_i32_0 : i32, i32
  }
  func.func @transform_4(%arg0: i32) -> (i32, i32) {
    %c0_i32 = arith.constant 0 : i32
    %c0_i32_0 = arith.constant 0 : i32
    %c0_i32_1 = arith.constant 0 : i32
    return %c0_i32, %c0_i32_0 : i32, i32
  }
  func.func @transform_5(%arg0: i32) -> (i32, i32) {
    %c0_i32 = arith.constant 0 : i32
    %c0_i32_0 = arith.constant 0 : i32
    %c0_i32_1 = arith.constant 0 : i32
    return %c0_i32, %c0_i32_0 : i32, i32
  }
  func.func @transform_6(%arg0: i32) -> (i32, i32) {
    %c0_i32 = arith.constant 0 : i32
    %c0_i32_0 = arith.constant 0 : i32
    %c0_i32_1 = arith.constant 0 : i32
    return %c0_i32, %c0_i32_0 : i32, i32
  }
  func.func @transform_7(%arg0: i32) -> (i32, i32) {
    %c0_i32 = arith.constant 0 : i32
    %c0_i32_0 = arith.constant 0 : i32
    %c0_i32_1 = arith.constant 0 : i32
    return %c0_i32, %c0_i32_0 : i32, i32
  }
  func.func @transform_8(%arg0: i32) -> (i32, i32) {
    %c0_i32 = arith.constant 0 : i32
    %c0_i32_0 = arith.constant 0 : i32
    %c0_i32_1 = arith.constant 0 : i32
    return %c0_i32, %c0_i32_0 : i32, i32
  }
  func.func @transform_9(%arg0: i32) -> (i32, i32) {
    %c0_i32 = arith.constant 0 : i32
    %c0_i32_0 = arith.constant 0 : i32
    return %c0_i32, %arg0 : i32, i32
  }
  func.func @transform_10(%arg0: i32) -> (i32, i32) {
    %c0_i32 = arith.constant 0 : i32
    %c0_i32_0 = arith.constant 0 : i32
    return %c0_i32, %arg0 : i32, i32
  }
}

</mosaic_0001>

<llo_original>
// kernel: tpu_custom_call.1
$region0: #{tpu_custom_call.1}
  #allocation0 [shape = 'u32[]', space=smem, size = 0x4, offset = 0x4, fixed_abs, tag = 'smem constant byte address 0x4 - core index']
  #allocation1 [shape = 'u32[144,128]{1,0:T(1,128)}', space=vmem, size = 0x12000, scoped, tag = 'internal scratch']
  #allocation2 [shape = 'f32[1,1]{1,0:T(1,128)S(1)}', space=vmem, size = 0x200, scoped, tag = 'scoped memory for tpu_custom_call.1']
  %s0 = inlined_call_operand.vmem [shape: f32[1,256], index: 0, kind: input, shape index: {}]
  %s1 = inlined_call_operand.vmem [shape: f32[1,128], index: 1, kind: input, shape index: {}]
  %s2 = inlined_call_operand.vmem [shape: f32[1,128], index: 2, kind: input, shape index: {}]
  %s3 = inlined_call_operand.vmem [shape: f32[16,1], index: 3, kind: input, shape index: {}]
  %s4 = inlined_call_operand.vmem [shape: f32[16,1], index: 4, kind: input, shape index: {}]
  %s5 = inlined_call_operand.vmem [shape: f32[16,16], index: 5, kind: input, shape index: {}]
  %s6 = inlined_call_operand.vmem [shape: f32[16,1], index: 6, kind: input, shape index: {}]
  %s7 = inlined_call_operand.vmem [shape: f32[16,1], index: 7, kind: input, shape index: {}]
  %s8 = inlined_call_operand.<no memory space> [shape: f32[1,1], index: 8, kind: input, shape index: {}]
  %s9 = inlined_call_operand.hbm [shape: f32[1,256], index: 9, kind: output, shape index: {0}]
  %s10 = inlined_call_operand.hbm [shape: f32[1,256], index: 10, kind: output, shape index: {1}]
  %11 = xla_tuple %s9, %s10
  %s12 = sld [smem:[#allocation0]]
  $region77: #{tpu_custom_call.1} parent=0
    _
  %s14 = ssub.s32 1, %s12
  %s15 = scalar_select 0, %s14, %s12
  %v16 = vstv %s8
  %17 = vst [vmem:[#allocation2] sm:$0x1] %v16
  $region1: #{tpu_custom_call.1} parent=0
    #allocation3 [shape = 'u8[1024]{0}', space=vmem, size = 0x400, scoped, tag = 'output window, operand 0']
    #allocation4 [shape = 's32[2]{0}', space=sflag, size = 0x8, scoped, tag = 'scoped memory for tpu_custom_call.1']
    #allocation5 [shape = 'u8[1024]{0}', space=vmem, size = 0x400, scoped, tag = 'output window, operand 1']
    #allocation6 [shape = 's32[2]{0}', space=sflag, size = 0x8, scoped, tag = 'scoped memory for tpu_custom_call.1']
    %18 = vsyncpa [#allocation4], 0
    %s19 = scalar_lea.sflag [#allocation4], 1
    %20 = vsyncpa %s19, 0
    %21 = vsyncpa [#allocation6], 0
    %s22 = scalar_lea.sflag [#allocation6], 1
    %23 = vsyncpa %s22, 0
    loop: start=0, step=1, limit=4
    $region2: #{tpu_custom_call.1} parent=1 // loop_pre_header
      _
    $region3: #{tpu_custom_call.1} parent=1 // loop_header
      %s25 = sphi 0, %s29
      %p26 = scmp.ge.s32.totalorder %s25, 4
      %s35 = sphi 0, %s37
      %s38 = sphi 0, %s35
      %s39 = sphi 0, %s38
      %s55 = sphi 0, %s39
      %s59 = sphi 0, %s59
      %s61 = sphi 0, %s59
      %s62 = sphi 0, %s61
      %s76 = sphi 0, %s62
      %s80 = sphi 0, %s80
      %s82 = sphi 0, %s80
      %s83 = sphi 0, %s82
      %s97 = sphi 0, %s83
      %s101 = sphi 0, %s101
      %s103 = sphi 0, %s101
      %s104 = sphi 0, %s103
      %s118 = sphi 0, %s104
      %s122 = sphi 0, %s122
      %s124 = sphi 0, %s122
      %s125 = sphi 0, %s124
      %s139 = sphi 0, %s125
      %s143 = sphi 0, %s143
      %s145 = sphi 0, %s143
      %s146 = sphi 0, %s145
      %s160 = sphi 0, %s146
      %s164 = sphi 0, %s164
      %s166 = sphi 0, %s164
      %s167 = sphi 0, %s166
      %s181 = sphi 0, %s167
      %s185 = sphi 0, %s185
      %s187 = sphi 0, %s185
      %s188 = sphi 0, %s187
      %s202 = sphi 0, %s188
      %s206 = sphi 0, %s206
      %s208 = sphi 0, %s206
      %s209 = sphi 0, %s208
      %s223 = sphi 0, %s209
      %s229 = sphi 0, %s231
      %s232 = sphi 0, %s229
      %s233 = sphi 0, %s232
      %s249 = sphi 0, %s233
      %s255 = sphi 0, %s257
      %s258 = sphi 0, %s255
      %s259 = sphi 0, %s258
      %s275 = sphi 0, %s259
    $region4: #{tpu_custom_call.1} parent=1 // loop_header_branch
      %28 = sbr.rel (%p26) target = $region8
    $region5: #{tpu_custom_call.1} parent=1 // loop_body
      %s30 = ssub.s32 %s25, 1
      %s31 = ssub.s32 %s25, 2
      %s32 = sadd.s32 %s25, 1
      %s33 = ssub.s32 %s25, %s32
      %p34 = scmp.eq.s32.totalorder %s33, 0
      %s36 = sadd.s32 %s35, 1
      %s37 = scalar_select %p34, %s35, %s36
      %p40 = pneg %p34
      %p41 = scmp.eq.s32.totalorder %s25, 1
      %p42 = por %p40, %p41
      %p43 = scmp.ne.s32.totalorder %s35, %s38
      %p44 = scmp.eq.s32.totalorder %s25, 0
      %p45 = por %p43, %p44
      %p46 = scmp.ne.s32.totalorder %s35, %s38
      %p47 = scmp.eq.s32.totalorder %s30, 1
      %p48 = por %p46, %p47
      %p49 = scmp.ne.s32.totalorder %s38, %s39
      %p50 = scmp.eq.s32.totalorder %s30, 0
      %p51 = por %p49, %p50
      %p52 = scmp.ne.s32.totalorder %s38, %s39
      %p53 = scmp.eq.s32.totalorder %s31, 1
      %p54 = por %p52, %p53
      %p56 = scmp.ne.s32.totalorder %s39, %s55
      %p57 = scmp.eq.s32.totalorder %s31, 0
      %p58 = por %p56, %p57
      %s60 = sadd.s32 %s59, 1
      %p63 = scmp.eq.s32.totalorder %s25, 1
      %p64 = scmp.ne.s32.totalorder %s59, %s61
      %p65 = scmp.eq.s32.totalorder %s25, 0
      %p66 = por %p64, %p65
      %p67 = scmp.ne.s32.totalorder %s59, %s61
      %p68 = scmp.eq.s32.totalorder %s30, 1
      %p69 = por %p67, %p68
      %p70 = scmp.ne.s32.totalorder %s61, %s62
      %p71 = scmp.eq.s32.totalorder %s30, 0
      %p72 = por %p70, %p71
      %p73 = scmp.ne.s32.totalorder %s61, %s62
      %p74 = scmp.eq.s32.totalorder %s31, 1
      %p75 = por %p73, %p74
      %p77 = scmp.ne.s32.totalorder %s62, %s76
      %p78 = scmp.eq.s32.totalorder %s31, 0
      %p79 = por %p77, %p78
      %s81 = sadd.s32 %s80, 1
      %p84 = scmp.eq.s32.totalorder %s25, 1
      %p85 = scmp.ne.s32.totalorder %s80, %s82
      %p86 = scmp.eq.s32.totalorder %s25, 0
      %p87 = por %p85, %p86
      %p88 = scmp.ne.s32.totalorder %s80, %s82
      %p89 = scmp.eq.s32.totalorder %s30, 1
      %p90 = por %p88, %p89
      %p91 = scmp.ne.s32.totalorder %s82, %s83
      %p92 = scmp.eq.s32.totalorder %s30, 0
      %p93 = por %p91, %p92
      %p94 = scmp.ne.s32.totalorder %s82, %s83
      %p95 = scmp.eq.s32.totalorder %s31, 1
      %p96 = por %p94, %p95
      %p98 = scmp.ne.s32.totalorder %s83, %s97
      %p99 = scmp.eq.s32.totalorder %s31, 0
      %p100 = por %p98, %p99
      %s102 = sadd.s32 %s101, 1
      %p105 = scmp.eq.s32.totalorder %s25, 1
      %p106 = scmp.ne.s32.totalorder %s101, %s103
      %p107 = scmp.eq.s32.totalorder %s25, 0
      %p108 = por %p106, %p107
      %p109 = scmp.ne.s32.totalorder %s101, %s103
      %p110 = scmp.eq.s32.totalorder %s30, 1
      %p111 = por %p109, %p110
      %p112 = scmp.ne.s32.totalorder %s103, %s104
      %p113 = scmp.eq.s32.totalorder %s30, 0
      %p114 = por %p112, %p113
      %p115 = scmp.ne.s32.totalorder %s103, %s104
      %p116 = scmp.eq.s32.totalorder %s31, 1
      %p117 = por %p115, %p116
      %p119 = scmp.ne.s32.totalorder %s104, %s118
      %p120 = scmp.eq.s32.totalorder %s31, 0
      %p121 = por %p119, %p120
      %s123 = sadd.s32 %s122, 1
      %p126 = scmp.eq.s32.totalorder %s25, 1
      %p127 = scmp.ne.s32.totalorder %s122, %s124
      %p128 = scmp.eq.s32.totalorder %s25, 0
      %p129 = por %p127, %p128
      %p130 = scmp.ne.s32.totalorder %s122, %s124
      %p131 = scmp.eq.s32.totalorder %s30, 1
      %p132 = por %p130, %p131
      %p133 = scmp.ne.s32.totalorder %s124, %s125
      %p134 = scmp.eq.s32.totalorder %s30, 0
      %p135 = por %p133, %p134
      %p136 = scmp.ne.s32.totalorder %s124, %s125
      %p137 = scmp.eq.s32.totalorder %s31, 1
      %p138 = por %p136, %p137
      %p140 = scmp.ne.s32.totalorder %s125, %s139
      %p141 = scmp.eq.s32.totalorder %s31, 0
      %p142 = por %p140, %p141
      %s144 = sadd.s32 %s143, 1
      %p147 = scmp.eq.s32.totalorder %s25, 1
      %p148 = scmp.ne.s32.totalorder %s143, %s145
      %p149 = scmp.eq.s32.totalorder %s25, 0
      %p150 = por %p148, %p149
      %p151 = scmp.ne.s32.totalorder %s143, %s145
      %p152 = scmp.eq.s32.totalorder %s30, 1
      %p153 = por %p151, %p152
      %p154 = scmp.ne.s32.totalorder %s145, %s146
      %p155 = scmp.eq.s32.totalorder %s30, 0
      %p156 = por %p154, %p155
      %p157 = scmp.ne.s32.totalorder %s145, %s146
      %p158 = scmp.eq.s32.totalorder %s31, 1
      %p159 = por %p157, %p158
      %p161 = scmp.ne.s32.totalorder %s146, %s160
      %p162 = scmp.eq.s32.totalorder %s31, 0
      %p163 = por %p161, %p162
      %s165 = sadd.s32 %s164, 1
      %p168 = scmp.eq.s32.totalorder %s25, 1
      %p169 = scmp.ne.s32.totalorder %s164, %s166
      %p170 = scmp.eq.s32.totalorder %s25, 0
      %p171 = por %p169, %p170
      %p172 = scmp.ne.s32.totalorder %s164, %s166
      %p173 = scmp.eq.s32.totalorder %s30, 1
      %p174 = por %p172, %p173
      %p175 = scmp.ne.s32.totalorder %s166, %s167
      %p176 = scmp.eq.s32.totalorder %s30, 0
      %p177 = por %p175, %p176
      %p178 = scmp.ne.s32.totalorder %s166, %s167
      %p179 = scmp.eq.s32.totalorder %s31, 1
      %p180 = por %p178, %p179
      %p182 = scmp.ne.s32.totalorder %s167, %s181
      %p183 = scmp.eq.s32.totalorder %s31, 0
      %p184 = por %p182, %p183
      %s186 = sadd.s32 %s185, 1
      %p189 = scmp.eq.s32.totalorder %s25, 1
      %p190 = scmp.ne.s32.totalorder %s185, %s187
      %p191 = scmp.eq.s32.totalorder %s25, 0
      %p192 = por %p190, %p191
      %p193 = scmp.ne.s32.totalorder %s185, %s187
      %p194 = scmp.eq.s32.totalorder %s30, 1
      %p195 = por %p193, %p194
      %p196 = scmp.ne.s32.totalorder %s187, %s188
      %p197 = scmp.eq.s32.totalorder %s30, 0
      %p198 = por %p196, %p197
      %p199 = scmp.ne.s32.totalorder %s187, %s188
      %p200 = scmp.eq.s32.totalorder %s31, 1
      %p201 = por %p199, %p200
      %p203 = scmp.ne.s32.totalorder %s188, %s202
      %p204 = scmp.eq.s32.totalorder %s31, 0
      %p205 = por %p203, %p204
      %s207 = sadd.s32 %s206, 1
      %p210 = scmp.eq.s32.totalorder %s25, 1
      %p211 = scmp.ne.s32.totalorder %s206, %s208
      %p212 = scmp.eq.s32.totalorder %s25, 0
      %p213 = por %p211, %p212
      %p214 = scmp.ne.s32.totalorder %s206, %s208
      %p215 = scmp.eq.s32.totalorder %s30, 1
      %p216 = por %p214, %p215
      %p217 = scmp.ne.s32.totalorder %s208, %s209
      %p218 = scmp.eq.s32.totalorder %s30, 0
      %p219 = por %p217, %p218
      %p220 = scmp.ne.s32.totalorder %s208, %s209
      %p221 = scmp.eq.s32.totalorder %s31, 1
      %p222 = por %p220, %p221
      %p224 = scmp.ne.s32.totalorder %s209, %s223
      %p225 = scmp.eq.s32.totalorder %s31, 0
      %p226 = por %p224, %p225
      %s227 = ssub.s32 %s25, %s32
      %p228 = scmp.eq.s32.totalorder %s227, 0
      %s230 = sadd.s32 %s229, 1
      %s231 = scalar_select %p228, %s229, %s230
      %p234 = pneg %p228
      %p235 = scmp.eq.s32.totalorder %s25, 1
      %p236 = por %p234, %p235
      %p237 = scmp.ne.s32.totalorder %s229, %s232
      %p238 = scmp.eq.s32.totalorder %s25, 0
      %p239 = por %p237, %p238
      %p240 = scmp.ne.s32.totalorder %s229, %s232
      %p241 = scmp.eq.s32.totalorder %s30, 1
      %p242 = por %p240, %p241
      %p243 = scmp.ne.s32.totalorder %s232, %s233
      %p244 = scmp.eq.s32.totalorder %s30, 0
      %p245 = por %p243, %p244
      %p246 = scmp.ne.s32.totalorder %s232, %s233
      %p247 = scmp.eq.s32.totalorder %s31, 1
      %p248 = por %p246, %p247
      %p250 = scmp.ne.s32.totalorder %s233, %s249
      %p251 = scmp.eq.s32.totalorder %s31, 0
      %p252 = por %p250, %p251
      %s253 = ssub.s32 %s25, %s32
      %p254 = scmp.eq.s32.totalorder %s253, 0
      %s256 = sadd.s32 %s255, 1
      %s257 = scalar_select %p254, %s255, %s256
      %p260 = pneg %p254
      %p261 = scmp.eq.s32.totalorder %s25, 1
      %p262 = por %p260, %p261
      %p263 = scmp.ne.s32.totalorder %s255, %s258
      %p264 = scmp.eq.s32.totalorder %s25, 0
      %p265 = por %p263, %p264
      %p266 = scmp.ne.s32.totalorder %s255, %s258
      %p267 = scmp.eq.s32.totalorder %s30, 1
      %p268 = por %p266, %p267
      %p269 = scmp.ne.s32.totalorder %s258, %s259
      %p270 = scmp.eq.s32.totalorder %s30, 0
      %p271 = por %p269, %p270
      %p272 = scmp.ne.s32.totalorder %s258, %s259
      %p273 = scmp.eq.s32.totalorder %s31, 1
      %p274 = por %p272, %p273
      %p276 = scmp.ne.s32.totalorder %s259, %s275
      %p277 = scmp.eq.s32.totalorder %s31, 0
      %p278 = por %p276, %p277
      %p279 = scmp.le.s32.totalorder 1, %s25
      %p280 = scmp.lt.s32.totalorder %s25, 3
      %p281 = pnand %p279, %p280
      %p282 = pneg %p281
      // Predicated region
      $region9: #{tpu_custom_call.1} parent=5 // pred_check
        _
      $region10: #{tpu_custom_call.1} parent=5 // pred_check_branch
        %284 = sbr.rel (%p281) target = $region12
      $region11: #{tpu_custom_call.1} parent=5 // pred_region
        %s285 = ssub.s32 %s25, 1
        // Predicated region
        $region13: #{tpu_custom_call.1} parent=11 // pred_check
          %p286 = pneg %p72
        $region14: #{tpu_custom_call.1} parent=11 // pred_check_branch
          %288 = sbr.rel (%p286) target = $region16
        $region15: #{tpu_custom_call.1} parent=11 // pred_region
          _
        $region16: #{tpu_custom_call.1} parent=11 // pred_fallthru
          _
        // Predicated region
        $region17: #{tpu_custom_call.1} parent=11 // pred_check
          %p289 = pneg %p93
        $region18: #{tpu_custom_call.1} parent=11 // pred_check_branch
          %291 = sbr.rel (%p289) target = $region20
        $region19: #{tpu_custom_call.1} parent=11 // pred_region
          _
        $region20: #{tpu_custom_call.1} parent=11 // pred_fallthru
          _
        // Predicated region
        $region21: #{tpu_custom_call.1} parent=11 // pred_check
          %p292 = pneg %p114
        $region22: #{tpu_custom_call.1} parent=11 // pred_check_branch
          %294 = sbr.rel (%p292) target = $region24
        $region23: #{tpu_custom_call.1} parent=11 // pred_region
          _
        $region24: #{tpu_custom_call.1} parent=11 // pred_fallthru
          _
        // Predicated region
        $region25: #{tpu_custom_call.1} parent=11 // pred_check
          %p295 = pneg %p135
        $region26: #{tpu_custom_call.1} parent=11 // pred_check_branch
          %297 = sbr.rel (%p295) target = $region28
        $region27: #{tpu_custom_call.1} parent=11 // pred_region
          _
        $region28: #{tpu_custom_call.1} parent=11 // pred_fallthru
          _
        // Predicated region
        $region29: #{tpu_custom_call.1} parent=11 // pred_check
          %p298 = pneg %p156
        $region30: #{tpu_custom_call.1} parent=11 // pred_check_branch
          %300 = sbr.rel (%p298) target = $region32
        $region31: #{tpu_custom_call.1} parent=11 // pred_region
          _
        $region32: #{tpu_custom_call.1} parent=11 // pred_fallthru
          _
        // Predicated region
        $region33: #{tpu_custom_call.1} parent=11 // pred_check
          %p301 = pneg %p177
        $region34: #{tpu_custom_call.1} parent=11 // pred_check_branch
          %303 = sbr.rel (%p301) target = $region36
        $region35: #{tpu_custom_call.1} parent=11 // pred_region
          _
        $region36: #{tpu_custom_call.1} parent=11 // pred_fallthru
          _
        // Predicated region
        $region37: #{tpu_custom_call.1} parent=11 // pred_check
          %p304 = pneg %p198
        $region38: #{tpu_custom_call.1} parent=11 // pred_check_branch
          %306 = sbr.rel (%p304) target = $region40
        $region39: #{tpu_custom_call.1} parent=11 // pred_region
          _
        $region40: #{tpu_custom_call.1} parent=11 // pred_fallthru
          _
        // Predicated region
        $region41: #{tpu_custom_call.1} parent=11 // pred_check
          %p307 = pneg %p219
        $region42: #{tpu_custom_call.1} parent=11 // pred_check_branch
          %309 = sbr.rel (%p307) target = $region44
        $region43: #{tpu_custom_call.1} parent=11 // pred_region
          _
        $region44: #{tpu_custom_call.1} parent=11 // pred_fallthru
          _
      $region12: #{tpu_custom_call.1} parent=5 // pred_fallthru
        _
      %p310 = scmp.lt.s32.totalorder %s25, 2
      // Predicated region
      $region45: #{tpu_custom_call.1} parent=5 // pred_check
        %p311 = pneg %p310
      $region46: #{tpu_custom_call.1} parent=5 // pred_check_branch
        %313 = sbr.rel (%p311) target = $region48
      $region47: #{tpu_custom_call.1} parent=5 // pred_region
        // Predicated region
        $region49: #{tpu_custom_call.1} parent=47 // pred_check
          %p314 = pneg %p45
        $region50: #{tpu_custom_call.1} parent=47 // pred_check_branch
          %316 = sbr.rel (%p314) target = $region52
        $region51: #{tpu_custom_call.1} parent=47 // pred_region
          %p317 = scmp.lt.s32.totalorder %s25, 1
          %s318 = scalar_select %p317, %s25, 1
          %s319 = scalar_lea.vmem %s0, %s318
        $region52: #{tpu_custom_call.1} parent=47 // pred_fallthru
          _
      $region48: #{tpu_custom_call.1} parent=5 // pred_fallthru
        _
      %p320 = scmp.le.s32.totalorder 1, %s25
      %p321 = scmp.lt.s32.totalorder %s25, 3
      %p322 = pnand %p320, %p321
      %p323 = pneg %p322
      // Predicated region
      $region53: #{tpu_custom_call.1} parent=5 // pred_check
        _
      $region54: #{tpu_custom_call.1} parent=5 // pred_check_branch
        %325 = sbr.rel (%p322) target = $region56
      $region55: #{tpu_custom_call.1} parent=5 // pred_region
        %s326 = ssub.s32 %s25, 1
        %p327 = scmp.lt.s32.totalorder %s30, 1
        %s328 = scalar_select %p327, %s30, 1
        %s329 = scalar_lea.vmem %s0, %s328
        %p330 = pneg %p51
        %p331 = pneg %p48
        %p332 = pneg %p72
        %p333 = pneg %p69
        %p334 = pneg %p93
        %p335 = pneg %p90
        %p336 = pneg %p114
        %p337 = pneg %p111
        %p338 = pneg %p135
        %p339 = pneg %p132
        %p340 = pneg %p156
        %p341 = pneg %p153
        %p342 = pneg %p177
        %p343 = pneg %p174
        %p344 = pneg %p198
        %p345 = pneg %p195
        %p346 = pneg %p219
        %p347 = pneg %p216
        %p348 = pneg %p245
        %p349 = pneg %p242
        %s350 = sand.u32 %s232, 1
        %s351 = scalar_lea.sflag [#allocation4], %s350
        %s352 = sand.u32 %s232, 1
        %s353 = scalar_lea.vmem [#allocation3], %s352
        %p354 = pneg %p271
        %p355 = pneg %p268
        %s356 = sand.u32 %s258, 1
        %s357 = scalar_lea.sflag [#allocation6], %s356
        %s358 = sand.u32 %s258, 1
        %s359 = scalar_lea.vmem [#allocation5], %s358
        %p360 = scmp.lt.s32.totalorder %s30, 1
        %s361 = scalar_select %p360, %s30, 1
        %s362 = scalar_lea.vmem %s0, %s361
        %v363 = vld [vmem:[%s3] sm:$0xff]
        %v364 = vld [vmem:[%s3 + $0x8] sm:$0xff]
        %v365 = vld [vmem:[%s4] sm:$0xff]
        %v366 = vld [vmem:[%s4 + $0x8] sm:$0xff]
        %v367 = vld [vmem:[%s5] sm:$0xff]
        %v368 = vld [vmem:[%s5 + $0x8] sm:$0xff]
        %v369 = vld [vmem:[%s6] sm:$0xff]
        %v370 = vld [vmem:[%s6 + $0x8] sm:$0xff]
        %v371 = vld [vmem:[%s7] sm:$0xff]
        %v372 = vld [vmem:[%s7 + $0x8] sm:$0xff]
        %v373 = vld [vmem:[#allocation2] sm:$0x1]
        %v374 = vld [vmem:[%s362] sm:$0x1]
        %v375 = vld [vmem:[%s1] sm:$0x1]
        %v376 = vld [vmem:[%s2] sm:$0x1]
        %378 = vset.pattern.permute.xlu0 0
        %379 = vperm.xlu0 %378, %v363
        %v380 = vpop.permute.xlu0 %379
        %383 = vset.pattern.permute.xlu0 0
        %384 = vperm.xlu0 %383, %v364
        %v385 = vpop.permute.xlu0 %384
        %v388 = vlaneseq
        %v389 = vshrl.u32 %v388, 7
        %v390 = vsub.s32 0, %v389
        %v391 = vrot.slane %v374, %v390
        %v393 = vmul.f32 %v380, %v391
        %v394 = vmul.f32 %v385, %v391
        %396 = vset.pattern.permute.xlu0 0
        %397 = vperm.xlu0 %396, %v365
        %v398 = vpop.permute.xlu0 %397
        %401 = vset.pattern.permute.xlu0 0
        %402 = vperm.xlu0 %401, %v366
        %v403 = vpop.permute.xlu0 %402
        %v405 = vadd.f32 %v393, %v398
        %v406 = vadd.f32 %v394, %v403
        %v407 = vtanh.pop %v405
        %v408 = vtanh.pop %v406
        %410 = vset.pattern.permute.xlu0 0
        %411 = vperm.xlu0 %410, %v369
        %v412 = vpop.permute.xlu0 %411
        %415 = vset.pattern.permute.xlu0 0
        %416 = vperm.xlu0 %415, %v370
        %v417 = vpop.permute.xlu0 %416
        %vm419 = vcmask 130048
        %v421 = vsel %vm419, %v367, 0
        %v424 = vsel %vm419, %v368, 0
        %426 = vmatprep.subr.mxu0 0.0
        %427 = vmatpush1.msra.mxu0 %v407
        %428 = vmatprep.subr.mxu0 0.0
        %429 = vmatpush1.msra.mxu0 %v408
        %430 = vmatprep.subr.mxu0 0.0
        %431 = vmatpush1.msra.mxu0 0.0
        %432 = vmatprep.subr.mxu0 0.0
        %433 = vmatpush1.msra.mxu0 0.0
        %434 = vmatprep.subr.mxu0 0.0
        %435 = vmatpush1.msra.mxu0 0.0
        %436 = vmatprep.subr.mxu0 0.0
        %437 = vmatpush1.msra.mxu0 0.0
        %438 = vmatprep.subr.mxu0 0.0
        %439 = vmatpush1.msra.mxu0 0.0
        %440 = vmatprep.subr.mxu0 0.0
        %441 = vmatpush1.msra.mxu0 0.0
        %442 = vmatprep.subr.mxu0 0.0
        %443 = vmatpush1.msra.mxu0 0.0
        %444 = vmatprep.subr.mxu0 0.0
        %445 = vmatpush1.msra.mxu0 0.0
        %446 = vmatprep.subr.mxu0 0.0
        %447 = vmatpush1.msra.mxu0 0.0
        %448 = vmatprep.subr.mxu0 0.0
        %449 = vmatpush1.msra.mxu0 0.0
        %450 = vmatprep.subr.mxu0 0.0
        %451 = vmatpush1.msra.mxu0 0.0
        %452 = vmatprep.subr.mxu0 0.0
        %453 = vmatpush1.msra.mxu0 0.0
        %454 = vmatprep.subr.mxu0 0.0
        %455 = vmatpush1.msra.mxu0 0.0
        %456 = vmatprep.subr.mxu0 0.0
        %457 = vmatpush1.msra.mxu0 0.0
        %458 = vmatprep.subr.mxu0 0.0
        %459 = vmatpush1.msra.mxu0 0.0
        %460 = vmatprep.subr.mxu0 0.0
        %461 = vmatpush1.msra.mxu0 0.0
        %462 = vmatprep.subr.mxu0 0.0
        %463 = vmatpush1.msra.mxu0 0.0
        %464 = vmatprep.subr.mxu0 0.0
        %465 = vmatpush1.msra.mxu0 0.0
        %466 = vmatprep.subr.mxu0 0.0
        %467 = vmatpush1.msra.mxu0 0.0
        %468 = vmatprep.subr.mxu0 0.0
        %469 = vmatpush1.msra.mxu0 0.0
        %470 = vmatprep.subr.mxu0 0.0
        %471 = vmatpush1.msra.mxu0 0.0
        %472 = vmatprep.subr.mxu0 0.0
        %473 = vmatpush1.msra.mxu0 0.0
        %474 = vmatprep.subr.mxu0 0.0
        %475 = vmatpush1.msra.mxu0 0.0
        %476 = vmatprep.subr.mxu0 0.0
        %477 = vmatpush1.msra.mxu0 0.0
        %478 = vmatprep.subr.mxu0 0.0
        %479 = vmatpush1.msra.mxu0 0.0
        %480 = vmatprep.subr.mxu0 0.0
        %481 = vmatpush1.msra.mxu0 0.0
        %482 = vmatprep.subr.mxu0 0.0
        %483 = vmatpush1.msra.mxu0 0.0
        %484 = vmatprep.subr.mxu0 0.0
        %485 = vmatpush1.msra.mxu0 0.0
        %486 = vmatprep.subr.mxu0 0.0
        %487 = vmatpush1.msra.mxu0 0.0
        %488 = vmatprep.subr.mxu0 0.0
        %489 = vmatpush1.msra.mxu0 0.0
        %490 = vmatprep.mubr.f32.mxu0 0.0
        %491 = vmatmul.mubr.f32.gmra.mrb[0].mxu0 %v421
        %v492 = vpop.f32.mrb[0].mxu0
        %v493 = vadd.f32 %v412, %v492
        %v494 = vpop.f32.mrb[0].mxu0
        %495 = vmatprep.mubr.f32.mxu0 0.0
        %496 = vmatmul.mubr.f32.gmra.mrb[0].mxu0 %v424
        %v497 = vpop.f32.mrb[0].mxu0
        %v498 = vadd.f32 %v417, %v497
        %v499 = vpop.f32.mrb[0].mxu0
        %500 = vdwg.mxu0
        %v501 = vtanh.pop %v493
        %v502 = vtanh.pop %v498
        %504 = vset.pattern.permute.xlu0 0
        %505 = vperm.xlu0 %504, %v371
        %v506 = vpop.permute.xlu0 %505
        %509 = vset.pattern.permute.xlu0 0
        %510 = vperm.xlu0 %509, %v372
        %v511 = vpop.permute.xlu0 %510
        %v513 = vmul.f32 %v501, %v506
        %v514 = vmul.f32 %v502, %v511
        %v515 = vadd.f32 %v513, %v514
        %v516 = vrot.slane %v515, 4
        %v517 = vadd.f32 %v515, %v516
        %v518 = vrot.slane %v517, 2
        %v519 = vadd.f32 %v517, %v518
        %v520 = vrot.slane %v519, 1
        %v521 = vadd.f32 %v519, %v520
        %523 = vset.pattern.permute.xlu0 0
        %524 = vperm.xlu0 %523, %v373
        %v525 = vpop.permute.xlu0 %524
        %v527 = vlaneseq
        %v528 = vshrl.u32 %v527, 7
        %v529 = vsub.s32 0, %v528
        %v530 = vrot.slane %v525, %v529
        %v531 = vadd.f32 %v521, %v530
        %v532 = vmul.f32 %v376, %v531
        %v533 = vxor.u32 %v532, 2147483648
        %v534 = vmul.f32 %v533, 1.442695
        %v535 = vpow.pop %v534
        %v536 = vadd.f32 %v535, 1.0
        %v537 = vrcp.pop %v536
        %v538 = vmul.f32 1.0, %v537
        %v539 = vmul.f32 %v375, %v538
        %v540 = vadd.f32 %v374, %v539
        %541 = vst [vmem:[%s353] sm:$0x1] %v540
        %v542 = vmul.f32 %v375, %v376
        %v543 = vmul.f32 %v542, %v538
        %v544 = vsub.f32 1.0, %v538
        %v545 = vmul.f32 %v543, %v544
        %v546 = vadd.f32 %v545, 1.0
        %v547 = vlog2.pop %v546
        %v548 = vmul.f32 %v547, 0.6931472
        %549 = vst [vmem:[%s359] sm:$0x1] %v548
        %s550 = sand.u32 %s232, 1
        %s551 = scalar_lea.sflag [#allocation4], %s550
        %s552 = sand.u32 %s232, 1
        %s553 = scalar_lea.vmem [#allocation3], %s552
        %s554 = sand.u32 %s258, 1
        %s555 = scalar_lea.sflag [#allocation6], %s554
        %s556 = sand.u32 %s258, 1
        %s557 = scalar_lea.vmem [#allocation5], %s556
        // Predicated region
        $region57: #{tpu_custom_call.1} parent=55 // pred_check
          %p558 = pneg %p242
        $region58: #{tpu_custom_call.1} parent=55 // pred_check_branch
          %560 = sbr.rel (%p558) target = $region60
        $region59: #{tpu_custom_call.1} parent=55 // pred_region
          %s562 = ssub.s32 16, 16
          %563 = vsyncadd %s551, %s562
          %s564 = smul.addr %s30, 16
          %s565 = scalar_lea.hbm %s9, %s564
          %s567 = sshll.u32 %s553, 4
          %s568 = int_to_ptr.vmem [resolvable:$true] %s567
          %570 = dma.vmem_to_hbm [thread:$0]  %s568, 16, %s565, %s551
        $region60: #{tpu_custom_call.1} parent=55 // pred_fallthru
          _
        // Predicated region
        $region61: #{tpu_custom_call.1} parent=55 // pred_check
          %p571 = pneg %p268
        $region62: #{tpu_custom_call.1} parent=55 // pred_check_branch
          %573 = sbr.rel (%p571) target = $region64
        $region63: #{tpu_custom_call.1} parent=55 // pred_region
          %s575 = ssub.s32 16, 16
          %576 = vsyncadd %s555, %s575
          %s577 = smul.addr %s30, 16
          %s578 = scalar_lea.hbm %s10, %s577
          %s580 = sshll.u32 %s557, 4
          %s581 = int_to_ptr.vmem [resolvable:$true] %s580
          %583 = dma.vmem_to_hbm [thread:$0]  %s581, 16, %s578, %s555
        $region64: #{tpu_custom_call.1} parent=55 // pred_fallthru
          _
      $region56: #{tpu_custom_call.1} parent=5 // pred_fallthru
        _
      %p584 = scmp.le.s32.totalorder 2, %s25
      // Predicated region
      $region65: #{tpu_custom_call.1} parent=5 // pred_check
        %p585 = pneg %p584
      $region66: #{tpu_custom_call.1} parent=5 // pred_check_branch
        %587 = sbr.rel (%p585) target = $region68
      $region67: #{tpu_custom_call.1} parent=5 // pred_region
        %s588 = ssub.s32 %s25, 2
        // Predicated region
        $region69: #{tpu_custom_call.1} parent=67 // pred_check
          %p589 = pneg %p248
        $region70: #{tpu_custom_call.1} parent=67 // pred_check_branch
          %591 = sbr.rel (%p589) target = $region72
        $region71: #{tpu_custom_call.1} parent=67 // pred_region
          %s592 = sand.u32 %s233, 1
          %s593 = scalar_lea.sflag [#allocation4], %s592
          %s594 = sand.u32 %s233, 1
          %s595 = scalar_lea.vmem [#allocation3], %s594
          %596 = dma.done %s593, 16
        $region72: #{tpu_custom_call.1} parent=67 // pred_fallthru
          _
        // Predicated region
        $region73: #{tpu_custom_call.1} parent=67 // pred_check
          %p597 = pneg %p274
        $region74: #{tpu_custom_call.1} parent=67 // pred_check_branch
          %599 = sbr.rel (%p597) target = $region76
        $region75: #{tpu_custom_call.1} parent=67 // pred_region
          %s600 = sand.u32 %s259, 1
          %s601 = scalar_lea.sflag [#allocation6], %s600
          %s602 = sand.u32 %s259, 1
          %s603 = scalar_lea.vmem [#allocation5], %s602
          %604 = dma.done %s601, 16
        $region76: #{tpu_custom_call.1} parent=67 // pred_fallthru
          _
      $region68: #{tpu_custom_call.1} parent=5 // pred_fallthru
        _
    $region6: #{tpu_custom_call.1} parent=1 // loop_footer
      %s29 = sadd.s32 1, %s25
    $region7: #{tpu_custom_call.1} parent=1 // loop_footer_branch
      %24 = sbr.rel target = $region3
    $region8: #{tpu_custom_call.1} parent=1 // loop_exit
      _
    %605 = vsyncpa [#allocation4], 1
    %s606 = scalar_lea.sflag [#allocation4], 1
    %607 = vsyncpa %s606, 1
    %608 = vsyncpa [#allocation6], 1
    %s609 = scalar_lea.sflag [#allocation6], 1
    %610 = vsyncpa %s609, 1

</llo_original>
